<compile_context>
chip_gen: v5e
topology: v5e:2x2
jax: 0.10.0
libtpu: 0.0.40
codegen_flags: <defaults>
</compile_context>

<pallas_src>
import functools

import jax
import jax.numpy as jnp
from jax.experimental import pallas as pl
from jax.experimental.pallas import tpu as pltpu

_LANE = 128  # lane width (last dim)


def _round_up(n, m):
    return ((n + m - 1) // m) * m


def _fused_mlp_kernel(*refs, n_layers):
    """refs = (x_ref, w0_ref[, wrest_ref], b_ref, o_ref).

    x_ref:    (B, in_f)                    unpadded input
    w0_ref:   (in_f, F_pad)                layer-0 weight, (in, out) layout
    wrest_ref:(n_layers-1, F_pad, F_pad)   remaining weights, (in, out) layout
    b_ref:    (n_layers, 1, F_pad)         all biases (f32)
    o_ref:    (B, F_pad)                   lane-dense padded output

    Zero padding keeps the math exact: padded hidden columns become
    sigmoid(0)=0.5 but multiply zero weight rows in the next layer.
    """
    x_ref = refs[0]
    w0_ref = refs[1]
    if n_layers > 1:
        wrest_ref = refs[2]
        b_ref = refs[3]
    else:
        wrest_ref = None
        b_ref = refs[2]
    o_ref = refs[-1]

    # Layer 0 (weights may be bf16; accumulate + bias/sigmoid in f32).
    h = jnp.dot(
        x_ref[...].astype(w0_ref.dtype),
        w0_ref[...],
        preferred_element_type=jnp.float32,
    )
    h = h + b_ref[0]

    for l in range(1, n_layers):
        h = jax.nn.sigmoid(h)  # f32 sigmoid (no bf16 EUP on v5e)
        w = wrest_ref[l - 1]
        h = jnp.dot(h.astype(w.dtype), w, preferred_element_type=jnp.float32)
        h = h + b_ref[l]

    o_ref[...] = h.astype(o_ref.dtype)


def prepare_params(params, weights_dtype=jnp.float32):
    """One-time prep: transpose to (in, out), zero-pad, and stack operands.

    params: list of (w, b) in PyTorch layout, w: (out, in), b: (1, out).
    Returns (w0, wrest, biases):
      w0:     (in_f, F_pad)
      wrest:  (n_layers-1, F_pad, F_pad) or None if n_layers == 1
      biases: (n_layers, 1, F_pad) float32
    """
    n_layers = len(params)
    out_dims = [w.shape[0] for w, _ in params]
    f_pad = _round_up(max(out_dims), _LANE)
    in_f = params[0][0].shape[1]

    # Layer 0: input dim left unpadded so x can be passed straight in.
    w0_pt, _ = params[0]
    w0 = (
        jnp.zeros((in_f, f_pad), weights_dtype)
        .at[:, : w0_pt.shape[0]]
        .set(w0_pt.T.astype(weights_dtype))
    )

    # Layers 1..n-1 stacked into a single operand.
    wrest = None
    if n_layers > 1:
        wrest = jnp.zeros((n_layers - 1, f_pad, f_pad), weights_dtype)
        for l in range(1, n_layers):
            w_pt, _ = params[l]
            out_f, in_l = w_pt.shape
            wrest = wrest.at[l - 1, :in_l, :out_f].set(w_pt.T.astype(weights_dtype))

    biases = jnp.zeros((n_layers, 1, f_pad), jnp.float32)
    for l, (_, b) in enumerate(params):
        bl = b.reshape(-1)
        biases = biases.at[l, 0, : bl.shape[0]].set(bl.astype(jnp.float32))

    return w0, wrest, biases


@functools.partial(jax.jit, static_argnames=("output_size",))
def _forward_impl(x, w0, wrest, biases, output_size):
    batch = x.shape[0]
    f_pad = w0.shape[1]
    n_layers = biases.shape[0]

    operands = [x, w0] + ([wrest] if wrest is not None else []) + [biases]

    # Raise the scoped-VMEM limit only when the resident operands need it
    # (v5e default is 16 MiB; v6e/v7x 32 MiB; v7x physical VMEM is 64 MiB).
    resident_bytes = sum(int(a.size) * a.dtype.itemsize for a in operands)
    resident_bytes += batch * f_pad * 4  # output
    compiler_params = None
    if resident_bytes > (12 << 20):
        compiler_params = pltpu.CompilerParams(
            vmem_limit_bytes=min(2 * resident_bytes + (16 << 20), 100 << 20)
        )

    vmem_spec = pl.BlockSpec(memory_space=pltpu.MemorySpace.VMEM)
    kernel = functools.partial(_fused_mlp_kernel, n_layers=n_layers)

    out_padded = pl.pallas_call(
        kernel,
        out_shape=jax.ShapeDtypeStruct((batch, f_pad), jnp.float32),
        in_specs=[vmem_spec] * len(operands),
        out_specs=vmem_spec,
        compiler_params=compiler_params,
    )(*operands)

    # Slice fuses into the same jitted executable (single dispatch per call).
    return out_padded[:, :output_size]


def mlp_disaggregator_forward(x, prepared_params, output_size):
    """Fused forward: (Linear -> Sigmoid) * (n-1) -> Linear, one dispatch."""
    w0, wrest, biases = prepared_params
    return _forward_impl(x, w0, wrest, biases, output_size)


def init_mlp_params(key, hidden_layers, output_size=2):
    """Deterministic parameter init mirroring MLPDisaggregator.__init__.

    hidden_layers: list of layer widths (first entry is the input size).
    Weights: xavier_uniform_; biases: PyTorch Linear default
    U(-1/sqrt(fan_in), 1/sqrt(fan_in)). Weights kept in PyTorch (out, in)
    layout here; prepare_params() transposes/pads/stacks them for the kernel.
    """
    sizes = list(hidden_layers) + [output_size]
    n_layers = len(hidden_layers)
    params = []
    for l in range(n_layers):
        fan_in, fan_out = sizes[l], sizes[l + 1]
        key, kw, kb = jax.random.split(key, 3)
        bound_w = jnp.sqrt(6.0 / (fan_in + fan_out))
        w = jax.random.uniform(
            kw, (fan_out, fan_in), jnp.float32, minval=-bound_w, maxval=bound_w
        )
        bound_b = 1.0 / jnp.sqrt(float(fan_in))
        b = jax.random.uniform(
            kb, (1, fan_out), jnp.float32, minval=-bound_b, maxval=bound_b
        )
        params.append((w, b))
    return params


def mlp_disaggregator_ref(x, params):
    """Pure-JAX reference matching MLPDisaggregator.forward."""
    n_layers = len(params)
    for l in range(n_layers - 1):
        w, b = params[l]
        x = jax.nn.sigmoid(x @ w.T + b)
    w, b = params[n_layers - 1]
    return x @ w.T + b


if __name__ == "__main__":
    key = jax.random.PRNGKey(0)
    key, kx = jax.random.split(key)

    # hidden_layers = [input_size, hidden1] ; output_size = 2 (two Linear layers)
    hidden_layers = [32, 32]
    output_size = 2
    batch = 8

    params = init_mlp_params(key, hidden_layers, output_size)
    prepared = prepare_params(params)  # f32 default keeps 1e-5 tolerance
    x = jax.random.normal(kx, (batch, hidden_layers[0]), jnp.float32)

    out = mlp_disaggregator_forward(x, prepared, output_size)
    out = jax.block_until_ready(out)

    ref = mlp_disaggregator_ref(x, params)
    assert out.shape == (batch, output_size)
    assert jnp.allclose(out, ref, atol=1e-5, rtol=1e-5)

    print("KERNEL_OK")
</pallas_src>

<mosaic_0001>
module attributes {stable_mosaic.version = 11 : i64} {
  func.func @_fused_mlp_kernel(%arg0: memref<8x32xf32, #tpu.memory_space<vmem>>, %arg1: memref<32x128xf32, #tpu.memory_space<vmem>>, %arg2: memref<1x128x128xf32, #tpu.memory_space<vmem>>, %arg3: memref<2x1x128xf32, #tpu.memory_space<vmem>>, %arg4: memref<8x128xf32, #tpu.memory_space<vmem>>) attributes {dimension_semantics = [], scalar_prefetch = 0 : i64, scratch_operands = 0 : i64, tpu.core_type = #tpu.core_type<tc>} {
    %c0 = arith.constant 0 : index
    %c0_0 = arith.constant 0 : index
    %0 = vector.load %arg0[%c0, %c0_0] : memref<8x32xf32, #tpu.memory_space<vmem>>, vector<8x32xf32>
    %c0_1 = arith.constant 0 : index
    %c0_2 = arith.constant 0 : index
    %1 = vector.load %arg1[%c0_1, %c0_2] : memref<32x128xf32, #tpu.memory_space<vmem>>, vector<32x128xf32>
    %cst = arith.constant dense<0.000000e+00> : vector<8x128xf32>
    %2 = tpu.matmul %0, %1, %cst {dimension_numbers = #tpu.dot_dimension_numbers<[1], [0], [0], [1], [0, 0, 1, 1], [], []>} : vector<8x32xf32>, vector<32x128xf32>, vector<8x128xf32> -> vector<8x128xf32>
    %c0_3 = arith.constant 0 : index
    %c0_4 = arith.constant 0 : index
    %c0_5 = arith.constant 0 : index
    %3 = vector.load %arg3[%c0_3, %c0_4, %c0_5] : memref<2x1x128xf32, #tpu.memory_space<vmem>>, vector<1x1x128xf32>
    %4 = vector.shape_cast %3 : vector<1x1x128xf32> to vector<1x128xf32>
    %5 = vector.broadcast %4 : vector<1x128xf32> to vector<8x128xf32>
    %6 = arith.addf %2, %5 : vector<8x128xf32>
    %7 = arith.negf %6 : vector<8x128xf32>
    %8 = math.exp %7 : vector<8x128xf32>
    %cst_6 = arith.constant 1.000000e+00 : f32
    %9 = vector.broadcast %cst_6 : f32 to vector<8x128xf32>
    %10 = arith.addf %9, %8 : vector<8x128xf32>
    %11 = arith.divf %9, %10 : vector<8x128xf32>
    %c0_7 = arith.constant 0 : index
    %c0_8 = arith.constant 0 : index
    %c0_9 = arith.constant 0 : index
    %12 = vector.load %arg2[%c0_7, %c0_8, %c0_9] : memref<1x128x128xf32, #tpu.memory_space<vmem>>, vector<1x128x128xf32>
    %13 = vector.shape_cast %12 : vector<1x128x128xf32> to vector<128x128xf32>
    %cst_10 = arith.constant dense<0.000000e+00> : vector<8x128xf32>
    %14 = tpu.matmul %11, %13, %cst_10 {dimension_numbers = #tpu.dot_dimension_numbers<[1], [0], [0], [1], [0, 0, 1, 1], [], []>} : vector<8x128xf32>, vector<128x128xf32>, vector<8x128xf32> -> vector<8x128xf32>
    %c1 = arith.constant 1 : index
    %c0_11 = arith.constant 0 : index
    %c0_12 = arith.constant 0 : index
    %15 = vector.load %arg3[%c1, %c0_11, %c0_12] : memref<2x1x128xf32, #tpu.memory_space<vmem>>, vector<1x1x128xf32>
    %16 = vector.shape_cast %15 : vector<1x1x128xf32> to vector<1x128xf32>
    %17 = vector.broadcast %16 : vector<1x128xf32> to vector<8x128xf32>
    %18 = arith.addf %14, %17 : vector<8x128xf32>
    %c0_13 = arith.constant 0 : index
    %c0_14 = arith.constant 0 : index
    %19 = vector.load %arg4[%c0_13, %c0_14] : memref<8x128xf32, #tpu.memory_space<vmem>>, vector<8x128xf32>
    tpu.vector_store %arg4[%c0_13, %c0_14], %18 {strides = array<i32>} : memref<8x128xf32, #tpu.memory_space<vmem>>, vector<8x128xf32>,
    return
  }
}

</mosaic_0001>

<llo_original>
// kernel: _forward_impl.1
$region0: #{_forward_impl.1}
  #allocation0 [shape = 'u32[]', space=smem, size = 0x4, offset = 0x4, fixed_abs, tag = 'smem constant byte address 0x4 - core index']
  #allocation1 [shape = 'u32[72,128]{1,0:T(1,128)}', space=vmem, size = 0x9000, scoped, tag = 'internal scratch']
  %s0 = inlined_call_operand.hbm [shape: f32[8,32], index: 0, kind: input, shape index: {}]
  %s1 = inlined_call_operand.hbm [shape: f32[32,128], index: 1, kind: input, shape index: {}]
  %s2 = inlined_call_operand.hbm [shape: f32[1,128,128], index: 2, kind: input, shape index: {}]
  %s3 = inlined_call_operand.vmem [shape: f32[2,1,128], index: 3, kind: input, shape index: {}]
  %s4 = inlined_call_operand.vmem [shape: f32[8,128], index: 4, kind: output, shape index: {}]
  %s5 = sld [smem:[#allocation0]]
  $region38: #{_forward_impl.1} parent=0
    _
  %s7 = ssub.s32 1, %s5
  %s8 = scalar_select 0, %s7, %s5
  $region1: #{_forward_impl.1} parent=0
    #allocation2 [shape = 'u8[4096]{0}', space=vmem, size = 0x1000, scoped, tag = 'input window, operand 0, single buffered']
    #allocation3 [shape = 's32[1]{0}', space=sflag, size = 0x4, scoped, tag = 'scoped memory for _forward_impl.1']
    #allocation4 [shape = 'u8[16384]{0}', space=vmem, size = 0x4000, scoped, tag = 'input window, operand 1, single buffered']
    #allocation5 [shape = 's32[1]{0}', space=sflag, size = 0x4, scoped, tag = 'scoped memory for _forward_impl.1']
    #allocation6 [shape = 'u8[65536]{0}', space=vmem, size = 0x10000, scoped, tag = 'input window, operand 2, single buffered']
    %9 = vsyncpa [#allocation3], 0
    %10 = vsyncpa [#allocation5], 0
    // Predicated region
    $region2: #{_forward_impl.1} parent=1 // pred_check
      _
    $region3: #{_forward_impl.1} parent=1 // pred_check_branch
      %12 = sbr.rel (0) target = $region5
    $region4: #{_forward_impl.1} parent=1 // pred_region
      %14 = vsyncadd [#allocation3], 0
      %s16 = sshll.u32 %s0, 4
      %s17 = int_to_ptr.hbm [resolvable:$true] %s16
      %s18 = sshll.u32 [#allocation2], 4
      %s19 = int_to_ptr.vmem [resolvable:$true] %s18
      %21 = dma.hbm_to_vmem [thread:$0]  %s17, 128, %s19, [#allocation3]
    $region5: #{_forward_impl.1} parent=1 // pred_fallthru
      _
    // Predicated region
    $region6: #{_forward_impl.1} parent=1 // pred_check
      _
    $region7: #{_forward_impl.1} parent=1 // pred_check_branch
      %23 = sbr.rel (0) target = $region9
    $region8: #{_forward_impl.1} parent=1 // pred_region
      %25 = vsyncadd [#allocation5], 0
      %s26 = sshll.u32 %s1, 4
      %s27 = int_to_ptr.hbm [resolvable:$true] %s26
      %s28 = sshll.u32 [#allocation4], 4
      %s29 = int_to_ptr.vmem [resolvable:$true] %s28
      %34 = dma.hbm_to_vmem [thread:$0]  %s27, 512, %s29, [#allocation5], 128, 128, 8
    $region9: #{_forward_impl.1} parent=1 // pred_fallthru
      _
    // Predicated region
    $region10: #{_forward_impl.1} parent=1 // pred_check
      _
    $region11: #{_forward_impl.1} parent=1 // pred_check_branch
      %36 = sbr.rel (0) target = $region13
    $region12: #{_forward_impl.1} parent=1 // pred_region
      %38 = vsyncadd [#allocation5], 0
      %s39 = sshll.u32 %s2, 4
      %s40 = int_to_ptr.hbm [resolvable:$true] %s39
      %s41 = sshll.u32 [#allocation6], 4
      %s42 = int_to_ptr.vmem [resolvable:$true] %s41
      %47 = dma.hbm_to_vmem [thread:$0]  %s40, 2048, %s42, [#allocation5], 128, 128, 8
    $region13: #{_forward_impl.1} parent=1 // pred_fallthru
      _
    // Predicated region
    $region14: #{_forward_impl.1} parent=1 // pred_check
      _
    $region15: #{_forward_impl.1} parent=1 // pred_check_branch
      %49 = sbr.rel (0) target = $region17
    $region16: #{_forward_impl.1} parent=1 // pred_region
      _
    $region17: #{_forward_impl.1} parent=1 // pred_fallthru
      _
    // Predicated region
    $region18: #{_forward_impl.1} parent=1 // pred_check
      _
    $region19: #{_forward_impl.1} parent=1 // pred_check_branch
      %51 = sbr.rel (0) target = $region21
    $region20: #{_forward_impl.1} parent=1 // pred_region
      %53 = dma.done [#allocation3], 128
    $region21: #{_forward_impl.1} parent=1 // pred_fallthru
      _
    // Predicated region
    $region22: #{_forward_impl.1} parent=1 // pred_check
      _
    $region23: #{_forward_impl.1} parent=1 // pred_check_branch
      %55 = sbr.rel (0) target = $region25
    $region24: #{_forward_impl.1} parent=1 // pred_region
      %57 = dma.done [#allocation5], 512
    $region25: #{_forward_impl.1} parent=1 // pred_fallthru
      _
    // Predicated region
    $region26: #{_forward_impl.1} parent=1 // pred_check
      _
    $region27: #{_forward_impl.1} parent=1 // pred_check_branch
      %59 = sbr.rel (0) target = $region29
    $region28: #{_forward_impl.1} parent=1 // pred_region
      %61 = dma.done [#allocation5], 2048
    $region29: #{_forward_impl.1} parent=1 // pred_fallthru
      _
    %v62 = vld [vmem:[#allocation2] sm:$0xff]
    %v63 = vld [vmem:[#allocation4] sm:$0xff]
    %v64 = vld [vmem:[#allocation4 + $0x8] sm:$0xff]
    %v65 = vld [vmem:[#allocation4 + $0x10] sm:$0xff]
    %v66 = vld [vmem:[#allocation4 + $0x18] sm:$0xff]
    %v67 = vld [vmem:[%s3] sm:$0x1]
    %v69 = vperm.slane %v67, 0
    %vm71 = vcmask 261120
    %v73 = vsel %vm71, %v62, 0
    %75 = vmatpush.msra.mxu0 0.0
    %76 = vmatpush.msra.mxu0 0.0
    %77 = vmatpush.msra.mxu0 0.0
    %78 = vmatpush.msra.mxu0 0.0
    %79 = vmatpush.msra.mxu0 0.0
    %80 = vmatpush.msra.mxu0 0.0
    %81 = vmatpush.msra.mxu0 0.0
    %82 = vmatpush.msra.mxu0 0.0
    %83 = vmatpush.msra.mxu0 0.0
    %84 = vmatpush.msra.mxu0 0.0
    %85 = vmatpush.msra.mxu0 0.0
    %86 = vmatpush.msra.mxu0 0.0
    %87 = vmatpush.msra.mxu0 %v66
    %88 = vmatpush.msra.mxu0 %v65
    %89 = vmatpush.msra.mxu0 %v64
    %90 = vmatpush.msra.mxu0 %v63
    %91 = vmatmul.f32.gmra.mxu0 %v73
    %v92 = vpop.f32.mrf.mxu0
    %v93 = vadd.f32 %v69, %v92
    %94 = vdwg.mxu0
    %v95 = vxor.u32 %v93, 2147483648
    %v96 = vmul.f32 %v95, 1.442695
    %v97 = vpow.pop %v96
    %v98 = vadd.f32 %v97, 1.0
    %v99 = vrcp.pop %v98
    %v100 = vmul.f32 %v98, %v99
    %v101 = vsub.f32 1.0, %v100
    %v102 = vmul.f32 %v99, %v101
    %v103 = vadd.f32 %v99, %v102
    %vm104 = vweird.f32 %v98
    %vm105 = vweird.f32 %v99
    %vm106 = vmor %vm104, %vm105
    %v107 = vsel %vm106, %v99, %v103
    %v108 = vand.u32 2147483647, %v98
    %vm109 = vcmp.eq.f32.partialorder %v108, 8.507059e+37
    %v110 = vand.u32 %v98, 2147483648
    %v111 = vor.u32 1.1754944e-38, %v110
    %v112 = vsel %vm109, %v111, %v107
    %v113 = vmul.f32 1.0, %v112
    %v114 = vld [vmem:[#allocation6] sm:$0xff]
    %v115 = vld [vmem:[#allocation6 + $0x8] sm:$0xff]
    %v116 = vld [vmem:[#allocation6 + $0x10] sm:$0xff]
    %v117 = vld [vmem:[#allocation6 + $0x18] sm:$0xff]
    %v118 = vld [vmem:[#allocation6 + $0x20] sm:$0xff]
    %v119 = vld [vmem:[#allocation6 + $0x28] sm:$0xff]
    %v120 = vld [vmem:[#allocation6 + $0x30] sm:$0xff]
    %v121 = vld [vmem:[#allocation6 + $0x38] sm:$0xff]
    %v122 = vld [vmem:[#allocation6 + $0x40] sm:$0xff]
    %v123 = vld [vmem:[#allocation6 + $0x48] sm:$0xff]
    %v124 = vld [vmem:[#allocation6 + $0x50] sm:$0xff]
    %v125 = vld [vmem:[#allocation6 + $0x58] sm:$0xff]
    %v126 = vld [vmem:[#allocation6 + $0x60] sm:$0xff]
    %v127 = vld [vmem:[#allocation6 + $0x68] sm:$0xff]
    %v128 = vld [vmem:[#allocation6 + $0x70] sm:$0xff]
    %v129 = vld [vmem:[#allocation6 + $0x78] sm:$0xff]
    %s130 = scalar_lea.vmem %s3, 1
    %v131 = vld [vmem:[%s130] sm:$0x1]
    %v133 = vperm.slane %v131, 0
    %135 = vmatpush.msra.mxu0 %v129
    %136 = vmatpush.msra.mxu0 %v128
    %137 = vmatpush.msra.mxu0 %v127
    %138 = vmatpush.msra.mxu0 %v126
    %139 = vmatpush.msra.mxu0 %v125
    %140 = vmatpush.msra.mxu0 %v124
    %141 = vmatpush.msra.mxu0 %v123
    %142 = vmatpush.msra.mxu0 %v122
    %143 = vmatpush.msra.mxu0 %v121
    %144 = vmatpush.msra.mxu0 %v120
    %145 = vmatpush.msra.mxu0 %v119
    %146 = vmatpush.msra.mxu0 %v118
    %147 = vmatpush.msra.mxu0 %v117
    %148 = vmatpush.msra.mxu0 %v116
    %149 = vmatpush.msra.mxu0 %v115
    %150 = vmatpush.msra.mxu0 %v114
    %151 = vmatmul.f32.gmra.mxu0 %v113
    %v152 = vpop.f32.mrf.mxu0
    %v153 = vadd.f32 %v133, %v152
    %154 = vdwg.mxu0
    %155 = vst [vmem:[%s4] sm:$0xff] %v153
    // Predicated region
    $region30: #{_forward_impl.1} parent=1 // pred_check
      _
    $region31: #{_forward_impl.1} parent=1 // pred_check_branch
      %157 = sbr.rel (0) target = $region33
    $region32: #{_forward_impl.1} parent=1 // pred_region
      _
    $region33: #{_forward_impl.1} parent=1 // pred_fallthru
      _
    // Predicated region
    $region34: #{_forward_impl.1} parent=1 // pred_check
      _
    $region35: #{_forward_impl.1} parent=1 // pred_check_branch
      %159 = sbr.rel (0) target = $region37
    $region36: #{_forward_impl.1} parent=1 // pred_region
      _
    $region37: #{_forward_impl.1} parent=1 // pred_fallthru
      _
    %160 = vsyncpa [#allocation3], 1
    %161 = vsyncpa [#allocation5], 1

</llo_original>
